<compile_context>
chip_gen: v7x
topology: tpu7x:2x2x1
jax: 0.10.0
libtpu: 0.0.40
codegen_flags: <defaults>
</compile_context>

<pallas_src>
import functools

import jax
import jax.numpy as jnp
from jax.experimental import pallas as pl
from jax.experimental.pallas import tpu as pltpu

FLOAT_MIN = float(jnp.finfo(jnp.float32).min)  # matches torch.finfo(torch.float32).min


def _round_up(x, m):
    return ((x + m - 1) // m) * m


def _pick_batch_tile(B):
    """Batch tile: multiple of 8; for large B force >= 2 grid steps (so v7x's two
    TensorCores both get tiles) while minimizing padded rows, preferring big tiles
    to amortize the ~0.35 us per-grid-step overhead."""
    if B <= 256:
        return _round_up(max(B, 8), 8)
    best_tb, best_key = 128, None
    for tb in (128, 256, 512, 1024, 2048):
        steps = pl.cdiv(B, tb)
        if steps < 2:
            continue
        key = (steps * tb - B, -tb)  # least padded rows, then biggest tile
        if best_key is None or key < best_key:
            best_key, best_tb = key, tb
    return best_tb


def _action_mask_fcn_kernel(x_ref, mask_ref,
                            w1_ref, b1_ref, w2_ref, b2_ref, w3_ref, b3_ref,
                            out_ref, xpad_ref, *, d_in, bf16_act):
    """Fused 2x tanh FCN + logits head + action masking for one batch tile.

    x_ref    : [TB, D]   f32 flattened observation tile (unpadded)
    mask_ref : [TB, A]   f32 action mask tile (0/1, unpadded)
    w*_ref   : bf16 weights padded to 128 multiples; b*_ref: f32 [1, *]
    out_ref  : [TB, A]   f32 masked logits tile (unpadded; masked vst)
    xpad_ref : [TB, Dp]  f32 scratch used to lane-pad x for an aligned MXU pass
    """
    tb, dp = xpad_ref.shape

    # Lane-pad the observation tile inside VMEM.  Runs every grid step (scratch is
    # per-core under megacore sharding; a handful of vector stores is negligible).
    # Padded columns hit zero weight rows, so they are mathematically inert.
    if dp > d_in:
        xpad_ref[:, d_in:] = jnp.zeros((tb, dp - d_in), xpad_ref.dtype)
    xpad_ref[:, :d_in] = x_ref[...]
    x = xpad_ref[...].astype(jnp.bfloat16)  # in-register cast; free vs. HBM traffic

    # Hidden layer 1 (tanh): bf16 MXU matmul, f32 accumulate.
    h1 = jnp.dot(x, w1_ref[...], preferred_element_type=jnp.float32) + b1_ref[...]
    h1 = jnp.tanh(h1.astype(jnp.bfloat16)) if bf16_act else jnp.tanh(h1).astype(jnp.bfloat16)

    # Hidden layer 2 (tanh).
    h2 = jnp.dot(h1, w2_ref[...], preferred_element_type=jnp.float32) + b2_ref[...]
    h2 = jnp.tanh(h2.astype(jnp.bfloat16)) if bf16_act else jnp.tanh(h2).astype(jnp.bfloat16)

    # Logits head (linear).  The 128-wide padded logits stay an in-kernel temporary.
    logits = jnp.dot(h2, w3_ref[...], preferred_element_type=jnp.float32) + b3_ref[...]

    # inf_mask = clamp(log(mask), min=FLOAT_MIN) == where(mask > 0, 0, FLOAT_MIN)
    # for binary masks: compare+select on the VPU, no transcendental log.
    # Keep everything f32 here: FLOAT_MIN (-3.4e38) would overflow to -inf in bf16.
    num_actions = out_ref.shape[1]
    inf_mask = jnp.where(mask_ref[...] > 0, jnp.float32(0.0), jnp.float32(FLOAT_MIN))
    out_ref[...] = logits[:, :num_actions] + inf_mask


def prepare_params(params):
    """Pad + cast the FCN parameters to lane-dense MXU tiles ONCE (module state).

    Call this outside the jitted forward so no per-call pad/cast XLA ops remain on
    the hot path (they previously cost several launches per forward at small B)."""
    w1, b1, w2, b2, w3, b3 = (jnp.asarray(p) for p in params)
    D, H = w1.shape
    A = w3.shape[1]
    Dp, Hp, Ap = _round_up(D, 128), _round_up(H, 128), _round_up(A, 128)
    w1p = jnp.zeros((Dp, Hp), jnp.bfloat16).at[:D, :H].set(w1.astype(jnp.bfloat16))
    w2p = jnp.zeros((Hp, Hp), jnp.bfloat16).at[:H, :H].set(w2.astype(jnp.bfloat16))
    w3p = jnp.zeros((Hp, Ap), jnp.bfloat16).at[:H, :A].set(w3.astype(jnp.bfloat16))
    b1p = jnp.zeros((1, Hp), jnp.float32).at[:, :H].set(b1.reshape(1, -1).astype(jnp.float32))
    b2p = jnp.zeros((1, Hp), jnp.float32).at[:, :H].set(b2.reshape(1, -1).astype(jnp.float32))
    b3p = jnp.zeros((1, Ap), jnp.float32).at[:, :A].set(b3.reshape(1, -1).astype(jnp.float32))
    return (w1p, b1p, w2p, b2p, w3p, b3p)


@functools.partial(jax.jit, static_argnames=("batch_tile", "bf16_activations"))
def action_mask_model_forward(x_flat, action_mask, prepared_params, *,
                              batch_tile=None, bf16_activations=False):
    """masked_logits = FCN(x_flat) + where(action_mask > 0, 0, FLOAT_MIN).

    x_flat          : [B, D] f32 flattened observation (unpadded).
    action_mask     : [B, A] f32 0/1 mask (unpadded).
    prepared_params : output of prepare_params() (padded bf16 weights, f32 biases).
    bf16_activations: run tanh in bf16 (set True on v6e/v7x native-bf16 EUP; keep
                      False on v5e)."""
    w1p, b1p, w2p, b2p, w3p, b3p = prepared_params
    B, D = x_flat.shape
    A = action_mask.shape[1]
    Dp, Hp = w1p.shape
    Ap = w3p.shape[1]

    TB = _pick_batch_tile(B) if batch_tile is None else batch_tile
    grid = (pl.cdiv(B, TB),)

    kernel = functools.partial(_action_mask_fcn_kernel, d_in=D, bf16_act=bf16_activations)

    batch_block = lambda shape: pl.BlockSpec(shape, lambda i: (i, 0))
    const_block = lambda shape: pl.BlockSpec(shape, lambda i: (0, 0))

    # Advisory cost hint so XLA can overlap this small kernel with surrounding ops.
    cost = pl.CostEstimate(
        flops=2 * B * (Dp * Hp + Hp * Hp + Hp * Ap),
        transcendentals=2 * B * Hp,
        bytes_accessed=(4 * B * (D + 2 * A)
                        + 2 * (Dp * Hp + Hp * Hp + Hp * Ap)
                        + 4 * (2 * Hp + Ap)),
    )

    return pl.pallas_call(
        kernel,
        out_shape=jax.ShapeDtypeStruct((B, A), jnp.float32),
        grid=grid,
        in_specs=[
            batch_block((TB, D)),    # x, unpadded f32 (cast + lane-pad in-kernel)
            batch_block((TB, A)),    # action_mask, unpadded f32
            const_block((Dp, Hp)),   # w1 (VMEM-resident across grid steps)
            const_block((1, Hp)),    # b1
            const_block((Hp, Hp)),   # w2
            const_block((1, Hp)),    # b2
            const_block((Hp, Ap)),   # w3
            const_block((1, Ap)),    # b3
        ],
        out_specs=batch_block((TB, A)),
        scratch_shapes=[pltpu.VMEM((TB, Dp), jnp.float32)],
        compiler_params=pltpu.CompilerParams(
            dimension_semantics=("parallel",)),  # shard batch tiles across TCs (v7x)
        cost_estimate=cost,
    )(x_flat, action_mask, w1p, b1p, w2p, b2p, w3p, b3p)


def init_params(key, obs_dim, hidden, num_actions):
    """Deterministic synthetic parameters (shapes match FullyConnectedNetwork with
    fcnet_hiddens=[hidden, hidden], tanh activation, logits head)."""
    k1, k2, k3 = jax.random.split(key, 3)
    s1 = 1.0 / jnp.sqrt(obs_dim)
    s2 = 1.0 / jnp.sqrt(hidden)
    w1 = jax.random.uniform(k1, (obs_dim, hidden), jnp.float32, -s1, s1)
    b1 = jnp.zeros((1, hidden), jnp.float32)
    w2 = jax.random.uniform(k2, (hidden, hidden), jnp.float32, -s2, s2)
    b2 = jnp.zeros((1, hidden), jnp.float32)
    w3 = jax.random.uniform(k3, (hidden, num_actions), jnp.float32, -s2, s2)
    b3 = jnp.zeros((1, num_actions), jnp.float32)
    return (w1, b1, w2, b2, w3, b3)


if __name__ == "__main__":
    # Connect4-like shapes: batch=8, board = 2 channels x 6 x 7 -> 84 flat,
    # hidden=32, 7 actions (one per column).
    B, C, Hb, Wb = 8, 2, 6, 7
    D = C * Hb * Wb          # 84
    HID = 32
    A = 7

    key = jax.random.PRNGKey(0)
    k_obs, k_mask, k_param = jax.random.split(key, 3)

    # NCHW observation, flattened row-major (matches torch .flatten on NCHW).
    obs_nchw = jax.random.normal(k_obs, (B, C, Hb, Wb), jnp.float32)
    x_flat = obs_nchw.reshape(B, D)

    # Binary action mask with at least one legal action per row.
    mask = (jax.random.uniform(k_mask, (B, A)) > 0.4).astype(jnp.float32)
    mask = mask.at[:, 0].set(1.0)

    params = init_params(k_param, D, HID, A)
    prepared = prepare_params(params)          # pad/cast ONCE (module state)

    out = action_mask_model_forward(x_flat, mask, prepared)
    out = jax.block_until_ready(out)

    # Reference check in plain f32 JAX (kernel uses bf16 matmul operands with
    # f32 accumulation, so compare with a bf16-appropriate tolerance).
    w1, b1, w2, b2, w3, b3 = params
    h1 = jnp.tanh(x_flat @ w1 + b1)
    h2 = jnp.tanh(h1 @ w2 + b2)
    logits = h2 @ w3 + b3
    ref = logits + jnp.where(mask > 0, 0.0, FLOAT_MIN)
    assert out.shape == (B, A)
    assert jnp.allclose(out, ref, rtol=2e-2, atol=2e-2), "mismatch vs reference"

    print("KERNEL_OK")
</pallas_src>

<mosaic_0001>
module attributes {stable_mosaic.version = 11 : i64} {
  func.func @_action_mask_fcn_kernel(%arg0: i32, %arg1: memref<8x84xf32, #tpu.memory_space<vmem>>, %arg2: memref<8x7xf32, #tpu.memory_space<vmem>>, %arg3: memref<128x128xbf16, #tpu.memory_space<vmem>>, %arg4: memref<1x128xf32, #tpu.memory_space<vmem>>, %arg5: memref<128x128xbf16, #tpu.memory_space<vmem>>, %arg6: memref<1x128xf32, #tpu.memory_space<vmem>>, %arg7: memref<128x128xbf16, #tpu.memory_space<vmem>>, %arg8: memref<1x128xf32, #tpu.memory_space<vmem>>, %arg9: memref<8x7xf32, #tpu.memory_space<vmem>>, %arg10: memref<8x128xf32, #tpu.memory_space<vmem>>) attributes {dimension_semantics = [#tpu.dimension_semantics<parallel>], iteration_bounds = array<i64: 1>, scalar_prefetch = 0 : i64, scratch_operands = 1 : i64, tpu.core_type = #tpu.core_type<tc>, window_params = [{transform_indices = @transform_0, window_bounds = array<i64: 8, 84>}, {transform_indices = @transform_1, window_bounds = array<i64: 8, 7>}, {pipeline_mode = #tpu.pipeline_mode<synchronous>, transform_indices = @transform_2, window_bounds = array<i64: 128, 128>}, {pipeline_mode = #tpu.pipeline_mode<synchronous>, transform_indices = @transform_3, window_bounds = array<i64: 1, 128>}, {pipeline_mode = #tpu.pipeline_mode<synchronous>, transform_indices = @transform_4, window_bounds = array<i64: 128, 128>}, {pipeline_mode = #tpu.pipeline_mode<synchronous>, transform_indices = @transform_5, window_bounds = array<i64: 1, 128>}, {pipeline_mode = #tpu.pipeline_mode<synchronous>, transform_indices = @transform_6, window_bounds = array<i64: 128, 128>}, {pipeline_mode = #tpu.pipeline_mode<synchronous>, transform_indices = @transform_7, window_bounds = array<i64: 1, 128>}, {transform_indices = @transform_8, window_bounds = array<i64: 8, 7>}]} {
    %cst = arith.constant 0.000000e+00 : f32
    %0 = vector.broadcast %cst : f32 to vector<8x44xf32>
    %c0 = arith.constant 0 : index
    %c84 = arith.constant 84 : index
    %1 = vector.load %arg10[%c0, %c84] : memref<8x128xf32, #tpu.memory_space<vmem>>, vector<8x44xf32>
    tpu.vector_store %arg10[%c0, %c84], %0 {strides = array<i32>} : memref<8x128xf32, #tpu.memory_space<vmem>>, vector<8x44xf32>,
    %c0_0 = arith.constant 0 : index
    %c0_1 = arith.constant 0 : index
    %2 = vector.load %arg1[%c0_0, %c0_1] : memref<8x84xf32, #tpu.memory_space<vmem>>, vector<8x84xf32>
    %c0_2 = arith.constant 0 : index
    %c0_3 = arith.constant 0 : index
    %3 = vector.load %arg10[%c0_2, %c0_3] : memref<8x128xf32, #tpu.memory_space<vmem>>, vector<8x84xf32>
    tpu.vector_store %arg10[%c0_2, %c0_3], %2 {strides = array<i32>} : memref<8x128xf32, #tpu.memory_space<vmem>>, vector<8x84xf32>,
    %c0_4 = arith.constant 0 : index
    %c0_5 = arith.constant 0 : index
    %4 = vector.load %arg10[%c0_4, %c0_5] : memref<8x128xf32, #tpu.memory_space<vmem>>, vector<8x128xf32>
    %5 = arith.truncf %4 : vector<8x128xf32> to vector<8x128xbf16>
    %c0_6 = arith.constant 0 : index
    %c0_7 = arith.constant 0 : index
    %6 = vector.load %arg3[%c0_6, %c0_7] : memref<128x128xbf16, #tpu.memory_space<vmem>>, vector<128x128xbf16>
    %cst_8 = arith.constant dense<0.000000e+00> : vector<8x128xf32>
    %7 = tpu.matmul %5, %6, %cst_8 {dimension_numbers = #tpu.dot_dimension_numbers<[1], [0], [0], [1], [0, 0, 1, 1], [], []>} : vector<8x128xbf16>, vector<128x128xbf16>, vector<8x128xf32> -> vector<8x128xf32>
    %c0_9 = arith.constant 0 : index
    %c0_10 = arith.constant 0 : index
    %8 = vector.load %arg4[%c0_9, %c0_10] : memref<1x128xf32, #tpu.memory_space<vmem>>, vector<1x128xf32>
    %9 = vector.broadcast %8 : vector<1x128xf32> to vector<8x128xf32>
    %10 = arith.addf %7, %9 : vector<8x128xf32>
    %11 = math.tanh %10 : vector<8x128xf32>
    %12 = arith.truncf %11 : vector<8x128xf32> to vector<8x128xbf16>
    %c0_11 = arith.constant 0 : index
    %c0_12 = arith.constant 0 : index
    %13 = vector.load %arg5[%c0_11, %c0_12] : memref<128x128xbf16, #tpu.memory_space<vmem>>, vector<128x128xbf16>
    %cst_13 = arith.constant dense<0.000000e+00> : vector<8x128xf32>
    %14 = tpu.matmul %12, %13, %cst_13 {dimension_numbers = #tpu.dot_dimension_numbers<[1], [0], [0], [1], [0, 0, 1, 1], [], []>} : vector<8x128xbf16>, vector<128x128xbf16>, vector<8x128xf32> -> vector<8x128xf32>
    %c0_14 = arith.constant 0 : index
    %c0_15 = arith.constant 0 : index
    %15 = vector.load %arg6[%c0_14, %c0_15] : memref<1x128xf32, #tpu.memory_space<vmem>>, vector<1x128xf32>
    %16 = vector.broadcast %15 : vector<1x128xf32> to vector<8x128xf32>
    %17 = arith.addf %14, %16 : vector<8x128xf32>
    %18 = math.tanh %17 : vector<8x128xf32>
    %19 = arith.truncf %18 : vector<8x128xf32> to vector<8x128xbf16>
    %c0_16 = arith.constant 0 : index
    %c0_17 = arith.constant 0 : index
    %20 = vector.load %arg7[%c0_16, %c0_17] : memref<128x128xbf16, #tpu.memory_space<vmem>>, vector<128x128xbf16>
    %cst_18 = arith.constant dense<0.000000e+00> : vector<8x128xf32>
    %21 = tpu.matmul %19, %20, %cst_18 {dimension_numbers = #tpu.dot_dimension_numbers<[1], [0], [0], [1], [0, 0, 1, 1], [], []>} : vector<8x128xbf16>, vector<128x128xbf16>, vector<8x128xf32> -> vector<8x128xf32>
    %c0_19 = arith.constant 0 : index
    %c0_20 = arith.constant 0 : index
    %22 = vector.load %arg8[%c0_19, %c0_20] : memref<1x128xf32, #tpu.memory_space<vmem>>, vector<1x128xf32>
    %23 = vector.broadcast %22 : vector<1x128xf32> to vector<8x128xf32>
    %24 = arith.addf %21, %23 : vector<8x128xf32>
    %c0_21 = arith.constant 0 : index
    %c0_22 = arith.constant 0 : index
    %25 = vector.load %arg2[%c0_21, %c0_22] : memref<8x7xf32, #tpu.memory_space<vmem>>, vector<8x7xf32>
    %cst_23 = arith.constant 0.000000e+00 : f32
    %26 = vector.broadcast %cst_23 : f32 to vector<8x7xf32>
    %27 = arith.cmpf ogt, %25, %26 : vector<8x7xf32>
    %cst_24 = arith.constant 0.000000e+00 : f32
    %cst_25 = arith.constant -3.40282347E+38 : f32
    %28 = vector.broadcast %cst_24 : f32 to vector<8x7xf32>
    %29 = vector.broadcast %cst_25 : f32 to vector<8x7xf32>
    %30 = arith.select %27, %28, %29 : vector<8x7xi1>, vector<8x7xf32>
    %31 = vector.extract_strided_slice %24 {offsets = [0, 0], sizes = [8, 7], strides = [1, 1]} : vector<8x128xf32> to vector<8x7xf32>
    %32 = arith.addf %31, %30 : vector<8x7xf32>
    %c0_26 = arith.constant 0 : index
    %c0_27 = arith.constant 0 : index
    %33 = vector.load %arg9[%c0_26, %c0_27] : memref<8x7xf32, #tpu.memory_space<vmem>>, vector<8x7xf32>
    tpu.vector_store %arg9[%c0_26, %c0_27], %32 {strides = array<i32>} : memref<8x7xf32, #tpu.memory_space<vmem>>, vector<8x7xf32>,
    return
  }
  func.func @transform_0(%arg0: i32) -> (i32, i32) {
    %c0_i32 = arith.constant 0 : i32
    %c0_i32_0 = arith.constant 0 : i32
    return %arg0, %c0_i32 : i32, i32
  }
  func.func @transform_1(%arg0: i32) -> (i32, i32) {
    %c0_i32 = arith.constant 0 : i32
    %c0_i32_0 = arith.constant 0 : i32
    return %arg0, %c0_i32 : i32, i32
  }
  func.func @transform_2(%arg0: i32) -> (i32, i32) {
    %c0_i32 = arith.constant 0 : i32
    %c0_i32_0 = arith.constant 0 : i32
    %c0_i32_1 = arith.constant 0 : i32
    return %c0_i32, %c0_i32_0 : i32, i32
  }
  func.func @transform_3(%arg0: i32) -> (i32, i32) {
    %c0_i32 = arith.constant 0 : i32
    %c0_i32_0 = arith.constant 0 : i32
    %c0_i32_1 = arith.constant 0 : i32
    return %c0_i32, %c0_i32_0 : i32, i32
  }
  func.func @transform_4(%arg0: i32) -> (i32, i32) {
    %c0_i32 = arith.constant 0 : i32
    %c0_i32_0 = arith.constant 0 : i32
    %c0_i32_1 = arith.constant 0 : i32
    return %c0_i32, %c0_i32_0 : i32, i32
  }
  func.func @transform_5(%arg0: i32) -> (i32, i32) {
    %c0_i32 = arith.constant 0 : i32
    %c0_i32_0 = arith.constant 0 : i32
    %c0_i32_1 = arith.constant 0 : i32
    return %c0_i32, %c0_i32_0 : i32, i32
  }
  func.func @transform_6(%arg0: i32) -> (i32, i32) {
    %c0_i32 = arith.constant 0 : i32
    %c0_i32_0 = arith.constant 0 : i32
    %c0_i32_1 = arith.constant 0 : i32
    return %c0_i32, %c0_i32_0 : i32, i32
  }
  func.func @transform_7(%arg0: i32) -> (i32, i32) {
    %c0_i32 = arith.constant 0 : i32
    %c0_i32_0 = arith.constant 0 : i32
    %c0_i32_1 = arith.constant 0 : i32
    return %c0_i32, %c0_i32_0 : i32, i32
  }
  func.func @transform_8(%arg0: i32) -> (i32, i32) {
    %c0_i32 = arith.constant 0 : i32
    %c0_i32_0 = arith.constant 0 : i32
    return %arg0, %c0_i32 : i32, i32
  }
}

</mosaic_0001>

<llo_original>
// kernel: action_mask_model_forward.1
$region0: #{action_mask_model_forward.1}
  #allocation0 [shape = 'u32[]', space=smem, size = 0x4, offset = 0x4, fixed_abs, tag = 'smem constant byte address 0x4 - core index']
  #allocation1 [shape = 'u32[144,128]{1,0:T(1,128)}', space=vmem, size = 0x12000, scoped, tag = 'internal scratch']
  #allocation2 [shape = 'f32[8,128]{1,0:T(8,128)}', space=vmem, size = 0x1000, scoped, tag = 'scratch operand']
  %s0 = inlined_call_operand.hbm [shape: f32[8,84], index: 0, kind: input, shape index: {}]
  %s1 = inlined_call_operand.hbm [shape: f32[8,7], index: 1, kind: input, shape index: {}]
  %s2 = inlined_call_operand.hbm [shape: bf16[128,128], index: 2, kind: input, shape index: {}]
  %s3 = inlined_call_operand.vmem [shape: f32[1,128], index: 3, kind: input, shape index: {}]
  %s4 = inlined_call_operand.hbm [shape: bf16[128,128], index: 4, kind: input, shape index: {}]
  %s5 = inlined_call_operand.vmem [shape: f32[1,128], index: 5, kind: input, shape index: {}]
  %s6 = inlined_call_operand.hbm [shape: bf16[128,128], index: 6, kind: input, shape index: {}]
  %s7 = inlined_call_operand.vmem [shape: f32[1,128], index: 7, kind: input, shape index: {}]
  %s8 = inlined_call_operand.hbm [shape: f32[8,7], index: 8, kind: output, shape index: {}]
  %s9 = sld [smem:[#allocation0]]
  $region62: #{action_mask_model_forward.1} parent=0
    _
  %s11 = ssub.s32 1, %s9
  %s12 = scalar_select 0, %s11, %s9
  $region1: #{action_mask_model_forward.1} parent=0
    #allocation3 [shape = 'u8[4096]{0}', space=vmem, size = 0x1000, scoped, tag = 'input window, operand 0, single buffered']
    #allocation4 [shape = 's32[1]{0}', space=sflag, size = 0x4, scoped, tag = 'scoped memory for action_mask_model_forward.1']
    #allocation5 [shape = 's32[1]{0}', space=sflag, size = 0x4, scoped, tag = 'scoped memory for action_mask_model_forward.1']
    #allocation6 [shape = 'u8[4096]{0}', space=vmem, size = 0x1000, scoped, tag = 'input window, operand 1, single buffered']
    #allocation7 [shape = 's32[1]{0}', space=sflag, size = 0x4, scoped, tag = 'scoped memory for action_mask_model_forward.1']
    #allocation8 [shape = 'u8[32768]{0}', space=vmem, size = 0x8000, scoped, tag = 'input window, operand 2, single buffered']
    #allocation9 [shape = 'u8[32768]{0}', space=vmem, size = 0x8000, scoped, tag = 'input window, operand 4, single buffered']
    #allocation10 [shape = 's32[1]{0}', space=sflag, size = 0x4, scoped, tag = 'scoped memory for action_mask_model_forward.1']
    #allocation11 [shape = 'u8[32768]{0}', space=vmem, size = 0x8000, scoped, tag = 'input window, operand 6, single buffered']
    #allocation12 [shape = 'u8[4096]{0}', space=vmem, size = 0x1000, scoped, tag = 'output window, operand 0, single buffered']
    %13 = vsyncpa [#allocation4], 0
    %14 = vsyncpa [#allocation7], 0
    %15 = vsyncpa [#allocation10], 0
    %16 = vsyncpa [#allocation5], 0
    // Predicated region
    $region2: #{action_mask_model_forward.1} parent=1 // pred_check
      _
    $region3: #{action_mask_model_forward.1} parent=1 // pred_check_branch
      %18 = sbr.rel (0) target = $region5
    $region4: #{action_mask_model_forward.1} parent=1 // pred_region
      %s20 = ssub.s32 128, 128
      %21 = vsyncadd [#allocation4], %s20
      %s23 = sshll.u32 [#allocation3], 4
      %s24 = int_to_ptr.vmem [resolvable:$true] %s23
      %26 = dma.hbm_to_vmem [thread:$0]  %s0, 128, %s24, [#allocation4]
    $region5: #{action_mask_model_forward.1} parent=1 // pred_fallthru
      _
    // Predicated region
    $region6: #{action_mask_model_forward.1} parent=1 // pred_check
      _
    $region7: #{action_mask_model_forward.1} parent=1 // pred_check_branch
      %28 = sbr.rel (0) target = $region9
    $region8: #{action_mask_model_forward.1} parent=1 // pred_region
      %s30 = ssub.s32 128, 128
      %31 = vsyncadd [#allocation7], %s30
      %s33 = sshll.u32 [#allocation6], 4
      %s34 = int_to_ptr.vmem [resolvable:$true] %s33
      %36 = dma.hbm_to_vmem [thread:$0]  %s1, 128, %s34, [#allocation7]
    $region9: #{action_mask_model_forward.1} parent=1 // pred_fallthru
      _
    // Predicated region
    $region10: #{action_mask_model_forward.1} parent=1 // pred_check
      _
    $region11: #{action_mask_model_forward.1} parent=1 // pred_check_branch
      %38 = sbr.rel (0) target = $region13
    $region12: #{action_mask_model_forward.1} parent=1 // pred_region
      %s40 = ssub.s32 1024, 1024
      %41 = vsyncadd [#allocation7], %s40
      %s42 = sshll.u32 [#allocation8], 4
      %s43 = int_to_ptr.vmem [resolvable:$true] %s42
      %48 = dma.hbm_to_vmem [thread:$0]  %s2, 1024, %s43, [#allocation7], 64, 64, 4
    $region13: #{action_mask_model_forward.1} parent=1 // pred_fallthru
      _
    // Predicated region
    $region14: #{action_mask_model_forward.1} parent=1 // pred_check
      _
    $region15: #{action_mask_model_forward.1} parent=1 // pred_check_branch
      %50 = sbr.rel (0) target = $region17
    $region16: #{action_mask_model_forward.1} parent=1 // pred_region
      _
    $region17: #{action_mask_model_forward.1} parent=1 // pred_fallthru
      _
    // Predicated region
    $region18: #{action_mask_model_forward.1} parent=1 // pred_check
      _
    $region19: #{action_mask_model_forward.1} parent=1 // pred_check_branch
      %52 = sbr.rel (0) target = $region21
    $region20: #{action_mask_model_forward.1} parent=1 // pred_region
      %s54 = ssub.s32 1024, 1024
      %55 = vsyncadd [#allocation10], %s54
      %s56 = sshll.u32 [#allocation9], 4
      %s57 = int_to_ptr.vmem [resolvable:$true] %s56
      %62 = dma.hbm_to_vmem [thread:$0]  %s4, 1024, %s57, [#allocation10], 64, 64, 4
    $region21: #{action_mask_model_forward.1} parent=1 // pred_fallthru
      _
    // Predicated region
    $region22: #{action_mask_model_forward.1} parent=1 // pred_check
      _
    $region23: #{action_mask_model_forward.1} parent=1 // pred_check_branch
      %64 = sbr.rel (0) target = $region25
    $region24: #{action_mask_model_forward.1} parent=1 // pred_region
      _
    $region25: #{action_mask_model_forward.1} parent=1 // pred_fallthru
      _
    // Predicated region
    $region26: #{action_mask_model_forward.1} parent=1 // pred_check
      _
    $region27: #{action_mask_model_forward.1} parent=1 // pred_check_branch
      %66 = sbr.rel (0) target = $region29
    $region28: #{action_mask_model_forward.1} parent=1 // pred_region
      %s68 = ssub.s32 1024, 1024
      %69 = vsyncadd [#allocation10], %s68
      %s70 = sshll.u32 [#allocation11], 4
      %s71 = int_to_ptr.vmem [resolvable:$true] %s70
      %76 = dma.hbm_to_vmem [thread:$0]  %s6, 1024, %s71, [#allocation10], 64, 64, 4
    $region29: #{action_mask_model_forward.1} parent=1 // pred_fallthru
      _
    // Predicated region
    $region30: #{action_mask_model_forward.1} parent=1 // pred_check
      _
    $region31: #{action_mask_model_forward.1} parent=1 // pred_check_branch
      %78 = sbr.rel (0) target = $region33
    $region32: #{action_mask_model_forward.1} parent=1 // pred_region
      _
    $region33: #{action_mask_model_forward.1} parent=1 // pred_fallthru
      _
    // Predicated region
    $region34: #{action_mask_model_forward.1} parent=1 // pred_check
      _
    $region35: #{action_mask_model_forward.1} parent=1 // pred_check_branch
      %80 = sbr.rel (0) target = $region37
    $region36: #{action_mask_model_forward.1} parent=1 // pred_region
      %81 = dma.done [#allocation4], 128
    $region37: #{action_mask_model_forward.1} parent=1 // pred_fallthru
      _
    // Predicated region
    $region38: #{action_mask_model_forward.1} parent=1 // pred_check
      _
    $region39: #{action_mask_model_forward.1} parent=1 // pred_check_branch
      %83 = sbr.rel (0) target = $region41
    $region40: #{action_mask_model_forward.1} parent=1 // pred_region
      %84 = dma.done [#allocation7], 128
    $region41: #{action_mask_model_forward.1} parent=1 // pred_fallthru
      _
    // Predicated region
    $region42: #{action_mask_model_forward.1} parent=1 // pred_check
      _
    $region43: #{action_mask_model_forward.1} parent=1 // pred_check_branch
      %86 = sbr.rel (0) target = $region45
    $region44: #{action_mask_model_forward.1} parent=1 // pred_region
      %87 = dma.done [#allocation7], 1024
    $region45: #{action_mask_model_forward.1} parent=1 // pred_fallthru
      _
    // Predicated region
    $region46: #{action_mask_model_forward.1} parent=1 // pred_check
      _
    $region47: #{action_mask_model_forward.1} parent=1 // pred_check_branch
      %89 = sbr.rel (0) target = $region49
    $region48: #{action_mask_model_forward.1} parent=1 // pred_region
      %90 = dma.done [#allocation10], 1024
    $region49: #{action_mask_model_forward.1} parent=1 // pred_fallthru
      _
    // Predicated region
    $region50: #{action_mask_model_forward.1} parent=1 // pred_check
      _
    $region51: #{action_mask_model_forward.1} parent=1 // pred_check_branch
      %92 = sbr.rel (0) target = $region53
    $region52: #{action_mask_model_forward.1} parent=1 // pred_region
      %93 = dma.done [#allocation10], 1024
    $region53: #{action_mask_model_forward.1} parent=1 // pred_fallthru
      _
    %vm95 = vcmask 1048224
    %96 = vst.msk [vmem:[#allocation2] sm:$0xff] %vm95, 0.0
    %v97 = vld [vmem:[#allocation3] sm:$0xff]
    %vm98 = vcmask 687104
    %99 = vst.msk [vmem:[#allocation2] sm:$0xff] %vm98, %v97
    %v100 = vld [vmem:[#allocation2] sm:$0xff]
    %v101 = vpack.c.bf16 %v100, %v100
    %v102 = vld [vmem:[#allocation8] sm:$0xf]
    %v103 = vld [vmem:[#allocation8 + $0x4] sm:$0xf]
    %v104 = vld [vmem:[#allocation8 + $0x8] sm:$0xf]
    %v105 = vld [vmem:[#allocation8 + $0xc] sm:$0xf]
    %v106 = vld [vmem:[#allocation8 + $0x10] sm:$0xf]
    %v107 = vld [vmem:[#allocation8 + $0x14] sm:$0xf]
    %v108 = vld [vmem:[#allocation8 + $0x18] sm:$0xf]
    %v109 = vld [vmem:[#allocation8 + $0x1c] sm:$0xf]
    %v110 = vld [vmem:[#allocation8 + $0x20] sm:$0xf]
    %v111 = vld [vmem:[#allocation8 + $0x24] sm:$0xf]
    %v112 = vld [vmem:[#allocation8 + $0x28] sm:$0xf]
    %v113 = vld [vmem:[#allocation8 + $0x2c] sm:$0xf]
    %v114 = vld [vmem:[#allocation8 + $0x30] sm:$0xf]
    %v115 = vld [vmem:[#allocation8 + $0x34] sm:$0xf]
    %v116 = vld [vmem:[#allocation8 + $0x38] sm:$0xf]
    %v117 = vld [vmem:[#allocation8 + $0x3c] sm:$0xf]
    %v118 = vld [vmem:[%s3] sm:$0x1]
    %v120 = vlaneseq
    %v121 = vshrl.u32 %v120, 7
    %v122 = vsub.s32 0, %v121
    %v123 = vrot.slane %v118, %v122
    %v141 = vunpack.c.l.b16 %v102
    %v142 = vunpack.c.l.b16 %v103
    %v143 = vunpack.c.l.b16 %v104
    %v144 = vunpack.c.l.b16 %v105
    %v145 = vunpack.c.l.b16 %v106
    %v146 = vunpack.c.l.b16 %v107
    %v147 = vunpack.c.l.b16 %v108
    %v148 = vunpack.c.l.b16 %v109
    %v149 = vunpack.c.l.b16 %v110
    %v150 = vunpack.c.l.b16 %v111
    %v151 = vunpack.c.l.b16 %v112
    %v152 = vunpack.c.l.b16 %v113
    %v153 = vunpack.c.l.b16 %v114
    %v154 = vunpack.c.l.b16 %v115
    %v155 = vunpack.c.l.b16 %v116
    %v156 = vunpack.c.l.b16 %v117
    %v157 = vpack.c.b16 %v142, %v141
    %v158 = vpack.c.b16 %v144, %v143
    %v159 = vpack.c.b16 %v146, %v145
    %v160 = vpack.c.b16 %v148, %v147
    %v161 = vpack.c.b16 %v150, %v149
    %v162 = vpack.c.b16 %v152, %v151
    %v163 = vpack.c.b16 %v154, %v153
    %v164 = vpack.c.b16 %v156, %v155
    %173 = vmatprep.subr.bf16.mxu0 0
    %174 = vmatpush1.bf16.msra.mxu0 %v157
    %175 = vmatprep.subr.bf16.mxu0 0
    %176 = vmatpush1.bf16.msra.mxu0 %v158
    %177 = vmatprep.subr.bf16.mxu0 0
    %178 = vmatpush1.bf16.msra.mxu0 %v159
    %179 = vmatprep.subr.bf16.mxu0 0
    %180 = vmatpush1.bf16.msra.mxu0 %v160
    %181 = vmatprep.subr.bf16.mxu0 0
    %182 = vmatpush1.bf16.msra.mxu0 %v161
    %183 = vmatprep.subr.bf16.mxu0 0
    %184 = vmatpush1.bf16.msra.mxu0 %v162
    %185 = vmatprep.subr.bf16.mxu0 0
    %186 = vmatpush1.bf16.msra.mxu0 %v163
    %187 = vmatprep.subr.bf16.mxu0 0
    %188 = vmatpush1.bf16.msra.mxu0 %v164
    %189 = vmatprep.subr.bf16.mxu0 0
    %190 = vmatpush1.bf16.msra.mxu0 0
    %191 = vmatprep.subr.bf16.mxu0 0
    %192 = vmatpush1.bf16.msra.mxu0 0
    %193 = vmatprep.subr.bf16.mxu0 0
    %194 = vmatpush1.bf16.msra.mxu0 0
    %195 = vmatprep.subr.bf16.mxu0 0
    %196 = vmatpush1.bf16.msra.mxu0 0
    %197 = vmatprep.subr.bf16.mxu0 0
    %198 = vmatpush1.bf16.msra.mxu0 0
    %199 = vmatprep.subr.bf16.mxu0 0
    %200 = vmatpush1.bf16.msra.mxu0 0
    %201 = vmatprep.subr.bf16.mxu0 0
    %202 = vmatpush1.bf16.msra.mxu0 0
    %203 = vmatprep.subr.bf16.mxu0 0
    %204 = vmatpush1.bf16.msra.mxu0 0
    %205 = vmatprep.mubr.bf16.mxu0 0
    %206 = vmatmul.mubr.bf16.gmra.mrb[0].mxu0 %v101
    %v207 = vpop.f32.mrb[0].mxu0
    %v208 = vadd.f32 %v123, %v207
    %v209 = vpop.f32.mrb[0].mxu0
    %v210 = vpop.f32.mrb[0].mxu0
    %v211 = vpop.f32.mrb[0].mxu0
    %212 = vdwg.mxu0
    %v213 = vtanh.pop %v208
    %v214 = vpack.c.bf16 %v213, %v213
    %v215 = vld [vmem:[#allocation9] sm:$0xf]
    %v216 = vld [vmem:[#allocation9 + $0x4] sm:$0xf]
    %v217 = vld [vmem:[#allocation9 + $0x8] sm:$0xf]
    %v218 = vld [vmem:[#allocation9 + $0xc] sm:$0xf]
    %v219 = vld [vmem:[#allocation9 + $0x10] sm:$0xf]
    %v220 = vld [vmem:[#allocation9 + $0x14] sm:$0xf]
    %v221 = vld [vmem:[#allocation9 + $0x18] sm:$0xf]
    %v222 = vld [vmem:[#allocation9 + $0x1c] sm:$0xf]
    %v223 = vld [vmem:[#allocation9 + $0x20] sm:$0xf]
    %v224 = vld [vmem:[#allocation9 + $0x24] sm:$0xf]
    %v225 = vld [vmem:[#allocation9 + $0x28] sm:$0xf]
    %v226 = vld [vmem:[#allocation9 + $0x2c] sm:$0xf]
    %v227 = vld [vmem:[#allocation9 + $0x30] sm:$0xf]
    %v228 = vld [vmem:[#allocation9 + $0x34] sm:$0xf]
    %v229 = vld [vmem:[#allocation9 + $0x38] sm:$0xf]
    %v230 = vld [vmem:[#allocation9 + $0x3c] sm:$0xf]
    %v231 = vld [vmem:[%s5] sm:$0x1]
    %v233 = vlaneseq
    %v234 = vshrl.u32 %v233, 7
    %v235 = vsub.s32 0, %v234
    %v236 = vrot.slane %v231, %v235
    %v254 = vunpack.c.l.b16 %v215
    %v255 = vunpack.c.l.b16 %v216
    %v256 = vunpack.c.l.b16 %v217
    %v257 = vunpack.c.l.b16 %v218
    %v258 = vunpack.c.l.b16 %v219
    %v259 = vunpack.c.l.b16 %v220
    %v260 = vunpack.c.l.b16 %v221
    %v261 = vunpack.c.l.b16 %v222
    %v262 = vunpack.c.l.b16 %v223
    %v263 = vunpack.c.l.b16 %v224
    %v264 = vunpack.c.l.b16 %v225
    %v265 = vunpack.c.l.b16 %v226
    %v266 = vunpack.c.l.b16 %v227
    %v267 = vunpack.c.l.b16 %v228
    %v268 = vunpack.c.l.b16 %v229
    %v269 = vunpack.c.l.b16 %v230
    %v270 = vpack.c.b16 %v255, %v254
    %v271 = vpack.c.b16 %v257, %v256
    %v272 = vpack.c.b16 %v259, %v258
    %v273 = vpack.c.b16 %v261, %v260
    %v274 = vpack.c.b16 %v263, %v262
    %v275 = vpack.c.b16 %v265, %v264
    %v276 = vpack.c.b16 %v267, %v266
    %v277 = vpack.c.b16 %v269, %v268
    %286 = vmatprep.subr.bf16.mxu0 0
    %287 = vmatpush1.bf16.msra.mxu0 %v270
    %288 = vmatprep.subr.bf16.mxu0 0
    %289 = vmatpush1.bf16.msra.mxu0 %v271
    %290 = vmatprep.subr.bf16.mxu0 0
    %291 = vmatpush1.bf16.msra.mxu0 %v272
    %292 = vmatprep.subr.bf16.mxu0 0
    %293 = vmatpush1.bf16.msra.mxu0 %v273
    %294 = vmatprep.subr.bf16.mxu0 0
    %295 = vmatpush1.bf16.msra.mxu0 %v274
    %296 = vmatprep.subr.bf16.mxu0 0
    %297 = vmatpush1.bf16.msra.mxu0 %v275
    %298 = vmatprep.subr.bf16.mxu0 0
    %299 = vmatpush1.bf16.msra.mxu0 %v276
    %300 = vmatprep.subr.bf16.mxu0 0
    %301 = vmatpush1.bf16.msra.mxu0 %v277
    %302 = vmatprep.subr.bf16.mxu0 0
    %303 = vmatpush1.bf16.msra.mxu0 0
    %304 = vmatprep.subr.bf16.mxu0 0
    %305 = vmatpush1.bf16.msra.mxu0 0
    %306 = vmatprep.subr.bf16.mxu0 0
    %307 = vmatpush1.bf16.msra.mxu0 0
    %308 = vmatprep.subr.bf16.mxu0 0
    %309 = vmatpush1.bf16.msra.mxu0 0
    %310 = vmatprep.subr.bf16.mxu0 0
    %311 = vmatpush1.bf16.msra.mxu0 0
    %312 = vmatprep.subr.bf16.mxu0 0
    %313 = vmatpush1.bf16.msra.mxu0 0
    %314 = vmatprep.subr.bf16.mxu0 0
    %315 = vmatpush1.bf16.msra.mxu0 0
    %316 = vmatprep.subr.bf16.mxu0 0
    %317 = vmatpush1.bf16.msra.mxu0 0
    %318 = vmatprep.mubr.bf16.mxu0 0
    %319 = vmatmul.mubr.bf16.gmra.mrb[0].mxu0 %v214
    %v320 = vpop.f32.mrb[0].mxu0
    %v321 = vadd.f32 %v236, %v320
    %v322 = vpop.f32.mrb[0].mxu0
    %v323 = vpop.f32.mrb[0].mxu0
    %v324 = vpop.f32.mrb[0].mxu0
    %325 = vdwg.mxu0
    %v326 = vtanh.pop %v321
    %v327 = vpack.c.bf16 %v326, %v326
    %v328 = vld [vmem:[#allocation11] sm:$0xf]
    %v329 = vld [vmem:[#allocation11 + $0x4] sm:$0xf]
    %v330 = vld [vmem:[#allocation11 + $0x8] sm:$0xf]
    %v331 = vld [vmem:[#allocation11 + $0xc] sm:$0xf]
    %v332 = vld [vmem:[#allocation11 + $0x10] sm:$0xf]
    %v333 = vld [vmem:[#allocation11 + $0x14] sm:$0xf]
    %v334 = vld [vmem:[#allocation11 + $0x18] sm:$0xf]
    %v335 = vld [vmem:[#allocation11 + $0x1c] sm:$0xf]
    %v336 = vld [vmem:[#allocation11 + $0x20] sm:$0xf]
    %v337 = vld [vmem:[#allocation11 + $0x24] sm:$0xf]
    %v338 = vld [vmem:[#allocation11 + $0x28] sm:$0xf]
    %v339 = vld [vmem:[#allocation11 + $0x2c] sm:$0xf]
    %v340 = vld [vmem:[#allocation11 + $0x30] sm:$0xf]
    %v341 = vld [vmem:[#allocation11 + $0x34] sm:$0xf]
    %v342 = vld [vmem:[#allocation11 + $0x38] sm:$0xf]
    %v343 = vld [vmem:[#allocation11 + $0x3c] sm:$0xf]
    %v344 = vld [vmem:[%s7] sm:$0x1]
    %v346 = vlaneseq
    %v347 = vshrl.u32 %v346, 7
    %v348 = vsub.s32 0, %v347
    %v349 = vrot.slane %v344, %v348
    %v367 = vunpack.c.l.b16 %v328
    %v368 = vunpack.c.l.b16 %v329
    %v369 = vunpack.c.l.b16 %v330
    %v370 = vunpack.c.l.b16 %v331
    %v371 = vunpack.c.l.b16 %v332
    %v372 = vunpack.c.l.b16 %v333
    %v373 = vunpack.c.l.b16 %v334
    %v374 = vunpack.c.l.b16 %v335
    %v375 = vunpack.c.l.b16 %v336
    %v376 = vunpack.c.l.b16 %v337
    %v377 = vunpack.c.l.b16 %v338
    %v378 = vunpack.c.l.b16 %v339
    %v379 = vunpack.c.l.b16 %v340
    %v380 = vunpack.c.l.b16 %v341
    %v381 = vunpack.c.l.b16 %v342
    %v382 = vunpack.c.l.b16 %v343
    %v383 = vpack.c.b16 %v368, %v367
    %v384 = vpack.c.b16 %v370, %v369
    %v385 = vpack.c.b16 %v372, %v371
    %v386 = vpack.c.b16 %v374, %v373
    %v387 = vpack.c.b16 %v376, %v375
    %v388 = vpack.c.b16 %v378, %v377
    %v389 = vpack.c.b16 %v380, %v379
    %v390 = vpack.c.b16 %v382, %v381
    %399 = vmatprep.subr.bf16.mxu0 0
    %400 = vmatpush1.bf16.msra.mxu0 %v383
    %401 = vmatprep.subr.bf16.mxu0 0
    %402 = vmatpush1.bf16.msra.mxu0 %v384
    %403 = vmatprep.subr.bf16.mxu0 0
    %404 = vmatpush1.bf16.msra.mxu0 %v385
    %405 = vmatprep.subr.bf16.mxu0 0
    %406 = vmatpush1.bf16.msra.mxu0 %v386
    %407 = vmatprep.subr.bf16.mxu0 0
    %408 = vmatpush1.bf16.msra.mxu0 %v387
    %409 = vmatprep.subr.bf16.mxu0 0
    %410 = vmatpush1.bf16.msra.mxu0 %v388
    %411 = vmatprep.subr.bf16.mxu0 0
    %412 = vmatpush1.bf16.msra.mxu0 %v389
    %413 = vmatprep.subr.bf16.mxu0 0
    %414 = vmatpush1.bf16.msra.mxu0 %v390
    %415 = vmatprep.subr.bf16.mxu0 0
    %416 = vmatpush1.bf16.msra.mxu0 0
    %417 = vmatprep.subr.bf16.mxu0 0
    %418 = vmatpush1.bf16.msra.mxu0 0
    %419 = vmatprep.subr.bf16.mxu0 0
    %420 = vmatpush1.bf16.msra.mxu0 0
    %421 = vmatprep.subr.bf16.mxu0 0
    %422 = vmatpush1.bf16.msra.mxu0 0
    %423 = vmatprep.subr.bf16.mxu0 0
    %424 = vmatpush1.bf16.msra.mxu0 0
    %425 = vmatprep.subr.bf16.mxu0 0
    %426 = vmatpush1.bf16.msra.mxu0 0
    %427 = vmatprep.subr.bf16.mxu0 0
    %428 = vmatpush1.bf16.msra.mxu0 0
    %429 = vmatprep.subr.bf16.mxu0 0
    %430 = vmatpush1.bf16.msra.mxu0 0
    %431 = vmatprep.mubr.bf16.mxu0 0
    %432 = vmatmul.mubr.bf16.gmra.mrb[0].mxu0 %v327
    %v433 = vpop.f32.mrb[0].mxu0
    %v434 = vadd.f32 %v349, %v433
    %v435 = vpop.f32.mrb[0].mxu0
    %v436 = vpop.f32.mrb[0].mxu0
    %v437 = vpop.f32.mrb[0].mxu0
    %438 = vdwg.mxu0
    %v439 = vld [vmem:[#allocation6] sm:$0xff]
    %vm440 = vcmp.gt.f32.partialorder %v439, 0.0
    %v441 = vsel %vm440, 0.0, -3.4028235e+38
    %v442 = vadd.f32 %v434, %v441
    %vm443 = vcmask 56320
    %444 = vst.msk [vmem:[#allocation12] sm:$0xff] %vm443, %v442
    // Predicated region
    $region54: #{action_mask_model_forward.1} parent=1 // pred_check
      _
    $region55: #{action_mask_model_forward.1} parent=1 // pred_check_branch
      %446 = sbr.rel (0) target = $region57
    $region56: #{action_mask_model_forward.1} parent=1 // pred_region
      %s448 = ssub.s32 128, 128
      %449 = vsyncadd [#allocation5], %s448
      %s451 = sshll.u32 [#allocation12], 4
      %s452 = int_to_ptr.vmem [resolvable:$true] %s451
      %454 = dma.vmem_to_hbm [thread:$0]  %s452, 128, %s8, [#allocation5]
    $region57: #{action_mask_model_forward.1} parent=1 // pred_fallthru
      _
    // Predicated region
    $region58: #{action_mask_model_forward.1} parent=1 // pred_check
      _
    $region59: #{action_mask_model_forward.1} parent=1 // pred_check_branch
      %456 = sbr.rel (0) target = $region61
    $region60: #{action_mask_model_forward.1} parent=1 // pred_region
      %457 = dma.done [#allocation5], 128
    $region61: #{action_mask_model_forward.1} parent=1 // pred_fallthru
      _
    %458 = vsyncpa [#allocation4], 1
    %459 = vsyncpa [#allocation7], 1
    %460 = vsyncpa [#allocation10], 1
    %461 = vsyncpa [#allocation5], 1

</llo_original>
